<compile_context>
chip_gen: v7x
topology: tpu7x:2x2x1
jax: 0.10.0
libtpu: 0.0.40
codegen_flags: <defaults>
</compile_context>

<pallas_src>
import functools

import jax
import jax.numpy as jnp
from jax.experimental import pallas as pl
from jax.experimental.pallas import tpu as pltpu

EPS = 1e-5
FUSED_BATCH_LIMIT = 4096     # up to here the whole net runs as one VMEM-resident kernel


def _default_tile_rows():
    """Batch-tile rows for the large-B tiled path.

    v5e/v6e: 128 MiB physical VMEM -> 8192-row f32 x tiles (2 x ~24.5 MiB
    double-buffered) amortize the ~0.35us/step pipeline overhead.
    v7x (64 MiB/TC) and unknown chips: stay at 4096 rows.
    """
    try:
        kind = jax.devices()[0].device_kind.lower()
    except Exception:
        kind = ""
    if ("v5 lite" in kind) or ("v5e" in kind) or ("v6 lite" in kind) or ("v6e" in kind):
        return 8192
    return 4096


def _pad_final_linear(w3, b3):
    # 16 output lanes: narrow (64 B/row) lane store instead of a 128-wide pad.
    w3p = jnp.zeros((24, 16), jnp.float32).at[:, :10].set(w3)
    b3p = jnp.zeros((1, 16), jnp.float32).at[:, :10].set(b3)
    return w3p, b3p


# --------------------------------------------------------------------------
# Fused path (small / moderate batch): one kernel, full batch VMEM resident.
# --------------------------------------------------------------------------
def _bn_relu(h, gamma, beta):
    """Training-mode BatchNorm1d + ReLU. Two-pass (mean, then squared
    deviations) statistics in f32 to avoid E[x^2]-E[x]^2 cancellation."""
    n = h.shape[0]
    mean = jnp.sum(h, axis=0, keepdims=True) * (1.0 / n)            # [1, F]
    d = h - mean
    var = jnp.sum(d * d, axis=0, keepdims=True) * (1.0 / n)         # biased
    scale = gamma * jax.lax.rsqrt(var + EPS)                        # EUP rsqrt
    shift = beta - mean * scale
    return jnp.maximum(h * scale + shift, 0.0)


def _fused_kernel(x_ref, w1_ref, g1_ref, be1_ref, w2_ref, g2_ref, be2_ref,
                  w3_ref, b3_ref, out_ref):
    # x arrives f32; cast to bf16 on the VPU (free under the DMA) for the MXU.
    h1 = jnp.dot(x_ref[...].astype(jnp.bfloat16), w1_ref[...],
                 preferred_element_type=jnp.float32)                 # [B, 48]
    a1 = _bn_relu(h1, g1_ref[...], be1_ref[...])
    h2 = jnp.dot(a1, w2_ref[...], preferred_element_type=jnp.float32)  # [B, 24]
    a2 = _bn_relu(h2, g2_ref[...], be2_ref[...])
    out_ref[...] = (jnp.dot(a2, w3_ref[...], preferred_element_type=jnp.float32)
                    + b3_ref[...])                                   # [B, 16]


@jax.jit
def _forward_fused(x_nchw, params):
    B = x_nchw.shape[0]
    x = x_nchw.reshape(B, -1)                      # [B, 784] f32 (no wrapper cast)
    (w1, b1, g1, be1, w2, b2, g2, be2, w3, b3) = params
    del b1, b2                                     # exact no-ops under train-mode BN

    w1_bf = w1.astype(jnp.bfloat16)                # 75 KB one-off, negligible
    w3p, b3p = _pad_final_linear(w3, b3)

    out = pl.pallas_call(
        _fused_kernel,
        out_shape=jax.ShapeDtypeStruct((B, 16), jnp.float32),
        compiler_params=pltpu.CompilerParams(vmem_limit_bytes=48 << 20),
    )(x, w1_bf, g1, be1, w2, g2, be2, w3p, b3p)
    return out[:, :10]


# --------------------------------------------------------------------------
# Tiled path (large batch): three batch-tiled, megacore-parallel kernels.
# --------------------------------------------------------------------------
@functools.partial(jax.jit, static_argnums=(2,))
def _forward_tiled(x_nchw, params, tile_rows):
    B = x_nchw.shape[0]
    x = x_nchw.reshape(B, -1)                      # [B, 784] f32
    (w1, b1, g1, be1, w2, b2, g2, be2, w3, b3) = params
    del b1, b2

    TB = max(8, (min(tile_rows, B) // 8) * 8)      # fixed tile, multiple of 8
    nb = pl.cdiv(B, TB)                            # trailing partial tile allowed

    w1_bf = w1.astype(jnp.bfloat16)
    w3p, b3p = _pad_final_linear(w3, b3)

    def _valid(i, shape):
        # Mask rows past the true batch (only the trailing tile is partial).
        rows = jax.lax.broadcasted_iota(jnp.int32, shape, 0) + i * TB
        return rows < B

    # ---- K1: x @ W1 -> h1 (bf16) + per-tile sum / sumsq of h1 (f32) --------
    def k1(x_ref, w1_ref, h1_ref, s_ref, q_ref):
        i = pl.program_id(0)
        h1 = jnp.dot(x_ref[...].astype(jnp.bfloat16), w1_ref[...],
                     preferred_element_type=jnp.float32)             # [TB, 48]
        h1m = jnp.where(_valid(i, h1.shape), h1, 0.0)
        s_ref[...] = jnp.sum(h1m, axis=0, keepdims=True)[None]       # [1,1,48]
        q_ref[...] = jnp.sum(h1m * h1m, axis=0, keepdims=True)[None]
        h1_ref[...] = h1.astype(jnp.bfloat16)                        # 96 B/row

    h1, s1, q1 = pl.pallas_call(
        k1,
        out_shape=(jax.ShapeDtypeStruct((B, 48), jnp.bfloat16),
                   jax.ShapeDtypeStruct((nb, 1, 48), jnp.float32),
                   jax.ShapeDtypeStruct((nb, 1, 48), jnp.float32)),
        grid=(nb,),
        in_specs=[pl.BlockSpec((TB, 784), lambda i: (i, 0)),
                  pl.BlockSpec((784, 48), lambda i: (0, 0))],
        out_specs=(pl.BlockSpec((TB, 48), lambda i: (i, 0)),
                   pl.BlockSpec((1, 1, 48), lambda i: (i, 0, 0)),
                   pl.BlockSpec((1, 1, 48), lambda i: (i, 0, 0))),
        compiler_params=pltpu.CompilerParams(
            dimension_semantics=("parallel",),
            vmem_limit_bytes=max(40 << 20, 2 * TB * 784 * 4 + (8 << 20)),
        ),
    )(x, w1_bf)

    def bn_affine(s, q, gamma, beta):
        # Reduce per-tile partials (tiny) -> folded BN scale/shift, f32.
        mean = jnp.sum(s, axis=(0, 1)) / B                          # [F]
        var = jnp.sum(q, axis=(0, 1)) / B - mean * mean             # biased
        scale = gamma * jax.lax.rsqrt(var + EPS)                    # [1, F]
        shift = beta - mean * scale
        return scale, shift

    scale1, shift1 = bn_affine(s1, q1, g1, be1)

    # ---- K2: BN1-affine + ReLU -> @W2 -> h2 (bf16) + per-tile stats --------
    def k2(h1_ref, sc_ref, sh_ref, w2_ref, h2_ref, s_ref, q_ref):
        i = pl.program_id(0)
        a1 = jnp.maximum(
            h1_ref[...].astype(jnp.float32) * sc_ref[...] + sh_ref[...], 0.0)
        h2 = jnp.dot(a1, w2_ref[...], preferred_element_type=jnp.float32)  # [TB,24]
        h2m = jnp.where(_valid(i, h2.shape), h2, 0.0)
        s_ref[...] = jnp.sum(h2m, axis=0, keepdims=True)[None]
        q_ref[...] = jnp.sum(h2m * h2m, axis=0, keepdims=True)[None]
        h2_ref[...] = h2.astype(jnp.bfloat16)

    h2, s2, q2 = pl.pallas_call(
        k2,
        out_shape=(jax.ShapeDtypeStruct((B, 24), jnp.bfloat16),
                   jax.ShapeDtypeStruct((nb, 1, 24), jnp.float32),
                   jax.ShapeDtypeStruct((nb, 1, 24), jnp.float32)),
        grid=(nb,),
        in_specs=[pl.BlockSpec((TB, 48), lambda i: (i, 0)),
                  pl.BlockSpec((1, 48), lambda i: (0, 0)),
                  pl.BlockSpec((1, 48), lambda i: (0, 0)),
                  pl.BlockSpec((48, 24), lambda i: (0, 0))],
        out_specs=(pl.BlockSpec((TB, 24), lambda i: (i, 0)),
                   pl.BlockSpec((1, 1, 24), lambda i: (i, 0, 0)),
                   pl.BlockSpec((1, 1, 24), lambda i: (i, 0, 0))),
        compiler_params=pltpu.CompilerParams(
            dimension_semantics=("parallel",), vmem_limit_bytes=32 << 20),
    )(h1, scale1, shift1, w2)

    scale2, shift2 = bn_affine(s2, q2, g2, be2)

    # ---- K3: BN2-affine + ReLU -> @W3 + b3 -> logits (narrow f32 store) ----
    def k3(h2_ref, sc_ref, sh_ref, w3_ref, b3_ref, out_ref):
        a2 = jnp.maximum(
            h2_ref[...].astype(jnp.float32) * sc_ref[...] + sh_ref[...], 0.0)
        out_ref[...] = (jnp.dot(a2, w3_ref[...],
                                preferred_element_type=jnp.float32) + b3_ref[...])

    out = pl.pallas_call(
        k3,
        out_shape=jax.ShapeDtypeStruct((B, 16), jnp.float32),
        grid=(nb,),
        in_specs=[pl.BlockSpec((TB, 24), lambda i: (i, 0)),
                  pl.BlockSpec((1, 24), lambda i: (0, 0)),
                  pl.BlockSpec((1, 24), lambda i: (0, 0)),
                  pl.BlockSpec((24, 16), lambda i: (0, 0)),
                  pl.BlockSpec((1, 16), lambda i: (0, 0))],
        out_specs=pl.BlockSpec((TB, 16), lambda i: (i, 0)),
        compiler_params=pltpu.CompilerParams(
            dimension_semantics=("parallel",), vmem_limit_bytes=32 << 20),
    )(h2, scale2, shift2, w3p, b3p)

    return out[:, :10]


def batchnorm_net_forward(x_nchw, params):
    """Forward pass equivalent to the PyTorch BatchNormalizationNet (train-mode BN)."""
    B = x_nchw.shape[0]
    if B <= FUSED_BATCH_LIMIT:
        return _forward_fused(x_nchw, params)
    return _forward_tiled(x_nchw, params, _default_tile_rows())


# --------------------------------------------------------------------------
# Params / reference
# --------------------------------------------------------------------------
def init_params(key):
    """PyTorch-default-style init: Linear W,b ~ U(-1/sqrt(fan_in), +); BN gamma=1,
    beta=0. Weights stored as [in_features, out_features] (torch weight.T)."""
    dims = [(28 * 28, 48), (48, 24), (24, 10)]
    keys = jax.random.split(key, 6)
    params = []
    for i, (fan_in, fan_out) in enumerate(dims):
        bound = 1.0 / jnp.sqrt(jnp.float32(fan_in))
        w = jax.random.uniform(keys[2 * i], (fan_in, fan_out),
                               minval=-bound, maxval=bound, dtype=jnp.float32)
        b = jax.random.uniform(keys[2 * i + 1], (1, fan_out),
                               minval=-bound, maxval=bound, dtype=jnp.float32)
        params.append(w)
        params.append(b)
        if i < 2:  # BatchNorm1d after the first two linears
            params.append(jnp.ones((1, fan_out), jnp.float32))    # gamma
            params.append(jnp.zeros((1, fan_out), jnp.float32))   # beta
    return tuple(params)  # (w1,b1,g1,be1, w2,b2,g2,be2, w3,b3)


def _reference_forward(x_nchw, params):
    """Pure-JAX f32 reference matching the PyTorch module exactly."""
    (w1, b1, g1, be1, w2, b2, g2, be2, w3, b3) = params
    x = x_nchw.reshape(x_nchw.shape[0], -1).astype(jnp.float32)

    def bn(h, gamma, beta):
        mean = jnp.mean(h, axis=0, keepdims=True)
        var = jnp.mean((h - mean) ** 2, axis=0, keepdims=True)
        return (h - mean) / jnp.sqrt(var + EPS) * gamma + beta

    h1 = x @ w1 + b1
    a1 = jnp.maximum(bn(h1, g1, be1), 0.0)
    h2 = a1 @ w2 + b2
    a2 = jnp.maximum(bn(h2, g2, be2), 0.0)
    return a2 @ w3 + b3


if __name__ == "__main__":
    key = jax.random.PRNGKey(0)
    k_x, k_x2, k_p = jax.random.split(key, 3)
    params = init_params(k_p)

    # --- small batch: fused single-kernel path -------------------------------
    B = 64
    x = jax.random.normal(k_x, (B, 1, 28, 28), dtype=jnp.float32)
    out = jax.block_until_ready(batchnorm_net_forward(x, params))
    assert out.shape == (B, 10) and out.dtype == jnp.float32
    ref = jax.block_until_ready(_reference_forward(x, params))
    diff_fused = float(jnp.max(jnp.abs(out - ref)))
    assert jnp.allclose(out, ref, atol=5e-2, rtol=5e-2), diff_fused

    # --- large-batch tiled path (forced with a small tile so shapes stay small;
    #     B=96 with TB=64 exercises the cdiv grid + trailing partial-tile mask).
    B2 = 96
    x2 = jax.random.normal(k_x2, (B2, 1, 28, 28), dtype=jnp.float32)
    out2 = jax.block_until_ready(_forward_tiled(x2, params, 64))
    assert out2.shape == (B2, 10) and out2.dtype == jnp.float32
    ref2 = jax.block_until_ready(_reference_forward(x2, params))
    diff_tiled = float(jnp.max(jnp.abs(out2 - ref2)))
    assert jnp.allclose(out2, ref2, atol=1e-1, rtol=1e-1), diff_tiled

    print("KERNEL_OK")
</pallas_src>

<mosaic_0001>
module attributes {stable_mosaic.version = 11 : i64} {
  func.func @_fused_kernel(%arg0: memref<64x784xf32, #tpu.memory_space<vmem>>, %arg1: memref<784x48xbf16, #tpu.memory_space<vmem>>, %arg2: memref<1x48xf32, #tpu.memory_space<vmem>>, %arg3: memref<1x48xf32, #tpu.memory_space<vmem>>, %arg4: memref<48x24xf32, #tpu.memory_space<vmem>>, %arg5: memref<1x24xf32, #tpu.memory_space<vmem>>, %arg6: memref<1x24xf32, #tpu.memory_space<vmem>>, %arg7: memref<24x16xf32, #tpu.memory_space<vmem>>, %arg8: memref<1x16xf32, #tpu.memory_space<vmem>>, %arg9: memref<64x16xf32, #tpu.memory_space<vmem>>) attributes {dimension_semantics = [], scalar_prefetch = 0 : i64, scratch_operands = 0 : i64, tpu.core_type = #tpu.core_type<tc>} {
    %c0 = arith.constant 0 : index
    %c0_0 = arith.constant 0 : index
    %0 = vector.load %arg0[%c0, %c0_0] : memref<64x784xf32, #tpu.memory_space<vmem>>, vector<64x784xf32>
    %1 = arith.truncf %0 : vector<64x784xf32> to vector<64x784xbf16>
    %c0_1 = arith.constant 0 : index
    %c0_2 = arith.constant 0 : index
    %2 = vector.load %arg1[%c0_1, %c0_2] : memref<784x48xbf16, #tpu.memory_space<vmem>>, vector<784x48xbf16>
    %cst = arith.constant dense<0.000000e+00> : vector<64x48xf32>
    %3 = tpu.matmul %1, %2, %cst {dimension_numbers = #tpu.dot_dimension_numbers<[1], [0], [0], [1], [0, 0, 1, 1], [], []>} : vector<64x784xbf16>, vector<784x48xbf16>, vector<64x48xf32> -> vector<64x48xf32>
    %c0_3 = arith.constant 0 : index
    %c0_4 = arith.constant 0 : index
    %4 = vector.load %arg2[%c0_3, %c0_4] : memref<1x48xf32, #tpu.memory_space<vmem>>, vector<1x48xf32>
    %c0_5 = arith.constant 0 : index
    %c0_6 = arith.constant 0 : index
    %5 = vector.load %arg3[%c0_5, %c0_6] : memref<1x48xf32, #tpu.memory_space<vmem>>, vector<1x48xf32>
    %cst_7 = arith.constant dense<0.000000e+00> : vector<48xf32>
    %6 = vector.multi_reduction <add>, %3, %cst_7 [0] : vector<64x48xf32> to vector<48xf32>
    %7 = vector.shape_cast %6 : vector<48xf32> to vector<1x48xf32>
    %cst_8 = arith.constant 1.562500e-02 : f32
    %8 = vector.broadcast %cst_8 : f32 to vector<1x48xf32>
    %9 = arith.mulf %7, %8 : vector<1x48xf32>
    %10 = vector.broadcast %9 : vector<1x48xf32> to vector<64x48xf32>
    %11 = arith.subf %3, %10 : vector<64x48xf32>
    %12 = arith.mulf %11, %11 : vector<64x48xf32>
    %cst_9 = arith.constant dense<0.000000e+00> : vector<48xf32>
    %13 = vector.multi_reduction <add>, %12, %cst_9 [0] : vector<64x48xf32> to vector<48xf32>
    %14 = vector.shape_cast %13 : vector<48xf32> to vector<1x48xf32>
    %cst_10 = arith.constant 1.562500e-02 : f32
    %15 = vector.broadcast %cst_10 : f32 to vector<1x48xf32>
    %16 = arith.mulf %14, %15 : vector<1x48xf32>
    %cst_11 = arith.constant 9.99999974E-6 : f32
    %17 = vector.broadcast %cst_11 : f32 to vector<1x48xf32>
    %18 = arith.addf %16, %17 : vector<1x48xf32>
    %19 = math.rsqrt %18 : vector<1x48xf32>
    %20 = arith.mulf %4, %19 : vector<1x48xf32>
    %21 = arith.mulf %9, %20 : vector<1x48xf32>
    %22 = arith.subf %5, %21 : vector<1x48xf32>
    %23 = vector.broadcast %20 : vector<1x48xf32> to vector<64x48xf32>
    %24 = arith.mulf %3, %23 : vector<64x48xf32>
    %25 = vector.broadcast %22 : vector<1x48xf32> to vector<64x48xf32>
    %26 = arith.addf %24, %25 : vector<64x48xf32>
    %cst_12 = arith.constant 0.000000e+00 : f32
    %27 = vector.broadcast %cst_12 : f32 to vector<64x48xf32>
    %28 = arith.maximumf %26, %27 : vector<64x48xf32>
    %c0_13 = arith.constant 0 : index
    %c0_14 = arith.constant 0 : index
    %29 = vector.load %arg4[%c0_13, %c0_14] : memref<48x24xf32, #tpu.memory_space<vmem>>, vector<48x24xf32>
    %cst_15 = arith.constant dense<0.000000e+00> : vector<64x24xf32>
    %30 = tpu.matmul %28, %29, %cst_15 {dimension_numbers = #tpu.dot_dimension_numbers<[1], [0], [0], [1], [0, 0, 1, 1], [], []>} : vector<64x48xf32>, vector<48x24xf32>, vector<64x24xf32> -> vector<64x24xf32>
    %c0_16 = arith.constant 0 : index
    %c0_17 = arith.constant 0 : index
    %31 = vector.load %arg5[%c0_16, %c0_17] : memref<1x24xf32, #tpu.memory_space<vmem>>, vector<1x24xf32>
    %c0_18 = arith.constant 0 : index
    %c0_19 = arith.constant 0 : index
    %32 = vector.load %arg6[%c0_18, %c0_19] : memref<1x24xf32, #tpu.memory_space<vmem>>, vector<1x24xf32>
    %cst_20 = arith.constant dense<0.000000e+00> : vector<24xf32>
    %33 = vector.multi_reduction <add>, %30, %cst_20 [0] : vector<64x24xf32> to vector<24xf32>
    %34 = vector.shape_cast %33 : vector<24xf32> to vector<1x24xf32>
    %cst_21 = arith.constant 1.562500e-02 : f32
    %35 = vector.broadcast %cst_21 : f32 to vector<1x24xf32>
    %36 = arith.mulf %34, %35 : vector<1x24xf32>
    %37 = vector.broadcast %36 : vector<1x24xf32> to vector<64x24xf32>
    %38 = arith.subf %30, %37 : vector<64x24xf32>
    %39 = arith.mulf %38, %38 : vector<64x24xf32>
    %cst_22 = arith.constant dense<0.000000e+00> : vector<24xf32>
    %40 = vector.multi_reduction <add>, %39, %cst_22 [0] : vector<64x24xf32> to vector<24xf32>
    %41 = vector.shape_cast %40 : vector<24xf32> to vector<1x24xf32>
    %cst_23 = arith.constant 1.562500e-02 : f32
    %42 = vector.broadcast %cst_23 : f32 to vector<1x24xf32>
    %43 = arith.mulf %41, %42 : vector<1x24xf32>
    %cst_24 = arith.constant 9.99999974E-6 : f32
    %44 = vector.broadcast %cst_24 : f32 to vector<1x24xf32>
    %45 = arith.addf %43, %44 : vector<1x24xf32>
    %46 = math.rsqrt %45 : vector<1x24xf32>
    %47 = arith.mulf %31, %46 : vector<1x24xf32>
    %48 = arith.mulf %36, %47 : vector<1x24xf32>
    %49 = arith.subf %32, %48 : vector<1x24xf32>
    %50 = vector.broadcast %47 : vector<1x24xf32> to vector<64x24xf32>
    %51 = arith.mulf %30, %50 : vector<64x24xf32>
    %52 = vector.broadcast %49 : vector<1x24xf32> to vector<64x24xf32>
    %53 = arith.addf %51, %52 : vector<64x24xf32>
    %cst_25 = arith.constant 0.000000e+00 : f32
    %54 = vector.broadcast %cst_25 : f32 to vector<64x24xf32>
    %55 = arith.maximumf %53, %54 : vector<64x24xf32>
    %c0_26 = arith.constant 0 : index
    %c0_27 = arith.constant 0 : index
    %56 = vector.load %arg7[%c0_26, %c0_27] : memref<24x16xf32, #tpu.memory_space<vmem>>, vector<24x16xf32>
    %cst_28 = arith.constant dense<0.000000e+00> : vector<64x16xf32>
    %57 = tpu.matmul %55, %56, %cst_28 {dimension_numbers = #tpu.dot_dimension_numbers<[1], [0], [0], [1], [0, 0, 1, 1], [], []>} : vector<64x24xf32>, vector<24x16xf32>, vector<64x16xf32> -> vector<64x16xf32>
    %c0_29 = arith.constant 0 : index
    %c0_30 = arith.constant 0 : index
    %58 = vector.load %arg8[%c0_29, %c0_30] : memref<1x16xf32, #tpu.memory_space<vmem>>, vector<1x16xf32>
    %59 = vector.broadcast %58 : vector<1x16xf32> to vector<64x16xf32>
    %60 = arith.addf %57, %59 : vector<64x16xf32>
    %c0_31 = arith.constant 0 : index
    %c0_32 = arith.constant 0 : index
    %61 = vector.load %arg9[%c0_31, %c0_32] : memref<64x16xf32, #tpu.memory_space<vmem>>, vector<64x16xf32>
    tpu.vector_store %arg9[%c0_31, %c0_32], %60 {strides = array<i32>} : memref<64x16xf32, #tpu.memory_space<vmem>>, vector<64x16xf32>,
    return
  }
}

</mosaic_0001>

<llo_original>
// kernel: _forward_fused.1
$region0: #{_forward_fused.1}
  #allocation0 [shape = 'u32[]', space=smem, size = 0x4, offset = 0x4, fixed_abs, tag = 'smem constant byte address 0x4 - core index']
  #allocation1 [shape = 'u32[144,128]{1,0:T(1,128)}', space=vmem, size = 0x12000, scoped, tag = 'internal scratch']
  %s0 = inlined_call_operand.vmem [shape: f32[64,784], index: 0, kind: input, shape index: {}]
  %s1 = inlined_call_operand.vmem [shape: bf16[784,48], index: 1, kind: input, shape index: {}]
  %s2 = inlined_call_operand.vmem [shape: f32[1,48], index: 2, kind: input, shape index: {}]
  %s3 = inlined_call_operand.vmem [shape: f32[1,48], index: 3, kind: input, shape index: {}]
  %s4 = inlined_call_operand.vmem [shape: f32[48,24], index: 4, kind: input, shape index: {}]
  %s5 = inlined_call_operand.vmem [shape: f32[1,24], index: 5, kind: input, shape index: {}]
  %s6 = inlined_call_operand.vmem [shape: f32[1,24], index: 6, kind: input, shape index: {}]
  %s7 = inlined_call_operand.vmem [shape: f32[24,16], index: 7, kind: input, shape index: {}]
  %s8 = inlined_call_operand.vmem [shape: f32[1,16], index: 8, kind: input, shape index: {}]
  %s9 = inlined_call_operand.vmem [shape: f32[64,16], index: 9, kind: output, shape index: {}]
  %s10 = sld [smem:[#allocation0]]
  $region46: #{_forward_fused.1} parent=0
    _
  %s12 = ssub.s32 1, %s10
  %s13 = scalar_select 0, %s12, %s10
  // Predicated region
  $region2: #{_forward_fused.1} parent=0 // pred_check
    _
  $region3: #{_forward_fused.1} parent=0 // pred_check_branch
    %15 = sbr.rel (0) target = $region5
  $region4: #{_forward_fused.1} parent=0 // pred_region
    _
  $region5: #{_forward_fused.1} parent=0 // pred_fallthru
    _
  // Predicated region
  $region6: #{_forward_fused.1} parent=0 // pred_check
    _
  $region7: #{_forward_fused.1} parent=0 // pred_check_branch
    %17 = sbr.rel (0) target = $region9
  $region8: #{_forward_fused.1} parent=0 // pred_region
    _
  $region9: #{_forward_fused.1} parent=0 // pred_fallthru
    _
  // Predicated region
  $region10: #{_forward_fused.1} parent=0 // pred_check
    _
  $region11: #{_forward_fused.1} parent=0 // pred_check_branch
    %19 = sbr.rel (0) target = $region13
  $region12: #{_forward_fused.1} parent=0 // pred_region
    _
  $region13: #{_forward_fused.1} parent=0 // pred_fallthru
    _
  // Predicated region
  $region14: #{_forward_fused.1} parent=0 // pred_check
    _
  $region15: #{_forward_fused.1} parent=0 // pred_check_branch
    %21 = sbr.rel (0) target = $region17
  $region16: #{_forward_fused.1} parent=0 // pred_region
    _
  $region17: #{_forward_fused.1} parent=0 // pred_fallthru
    _
  // Predicated region
  $region18: #{_forward_fused.1} parent=0 // pred_check
    _
  $region19: #{_forward_fused.1} parent=0 // pred_check_branch
    %23 = sbr.rel (0) target = $region21
  $region20: #{_forward_fused.1} parent=0 // pred_region
    _
  $region21: #{_forward_fused.1} parent=0 // pred_fallthru
    _
  // Predicated region
  $region22: #{_forward_fused.1} parent=0 // pred_check
    _
  $region23: #{_forward_fused.1} parent=0 // pred_check_branch
    %25 = sbr.rel (0) target = $region25
  $region24: #{_forward_fused.1} parent=0 // pred_region
    _
  $region25: #{_forward_fused.1} parent=0 // pred_fallthru
    _
  // Predicated region
  $region26: #{_forward_fused.1} parent=0 // pred_check
    _
  $region27: #{_forward_fused.1} parent=0 // pred_check_branch
    %27 = sbr.rel (0) target = $region29
  $region28: #{_forward_fused.1} parent=0 // pred_region
    _
  $region29: #{_forward_fused.1} parent=0 // pred_fallthru
    _
  // Predicated region
  $region30: #{_forward_fused.1} parent=0 // pred_check
    _
  $region31: #{_forward_fused.1} parent=0 // pred_check_branch
    %29 = sbr.rel (0) target = $region33
  $region32: #{_forward_fused.1} parent=0 // pred_region
    _
  $region33: #{_forward_fused.1} parent=0 // pred_fallthru
    _
  // Predicated region
  $region34: #{_forward_fused.1} parent=0 // pred_check
    _
  $region35: #{_forward_fused.1} parent=0 // pred_check_branch
    %31 = sbr.rel (0) target = $region37
  $region36: #{_forward_fused.1} parent=0 // pred_region
    _
  $region37: #{_forward_fused.1} parent=0 // pred_fallthru
    _
  %v33 = vld [vmem:[%s0] sm:$0xff]
  %v34 = vld [vmem:[%s0 + $0x8] sm:$0xff]
  %v35 = vld [vmem:[%s0 + $0x10] sm:$0xff]
  %v36 = vld [vmem:[%s0 + $0x18] sm:$0xff]
  %v37 = vld [vmem:[%s0 + $0x20] sm:$0xff]
  %v38 = vld [vmem:[%s0 + $0x28] sm:$0xff]
  %v39 = vld [vmem:[%s0 + $0x30] sm:$0xff]
  %v40 = vld [vmem:[%s0 + $0x38] sm:$0xff]
  %v41 = vld [vmem:[%s0 + $0x40] sm:$0xff]
  %v42 = vld [vmem:[%s0 + $0x48] sm:$0xff]
  %v43 = vld [vmem:[%s0 + $0x50] sm:$0xff]
  %v44 = vld [vmem:[%s0 + $0x58] sm:$0xff]
  %v45 = vld [vmem:[%s0 + $0x60] sm:$0xff]
  %v46 = vld [vmem:[%s0 + $0x68] sm:$0xff]
  %v47 = vld [vmem:[%s0 + $0x70] sm:$0xff]
  %v48 = vld [vmem:[%s0 + $0x78] sm:$0xff]
  %v49 = vld [vmem:[%s0 + $0x80] sm:$0xff]
  %v50 = vld [vmem:[%s0 + $0x88] sm:$0xff]
  %v51 = vld [vmem:[%s0 + $0x90] sm:$0xff]
  %v52 = vld [vmem:[%s0 + $0x98] sm:$0xff]
  %v53 = vld [vmem:[%s0 + $0xa0] sm:$0xff]
  %v54 = vld [vmem:[%s0 + $0xa8] sm:$0xff]
  %v55 = vld [vmem:[%s0 + $0xb0] sm:$0xff]
  %v56 = vld [vmem:[%s0 + $0xb8] sm:$0xff]
  %v57 = vld [vmem:[%s0 + $0xc0] sm:$0xff]
  %v58 = vld [vmem:[%s0 + $0xc8] sm:$0xff]
  %v59 = vld [vmem:[%s0 + $0xd0] sm:$0xff]
  %v60 = vld [vmem:[%s0 + $0xd8] sm:$0xff]
  %v61 = vld [vmem:[%s0 + $0xe0] sm:$0xff]
  %v62 = vld [vmem:[%s0 + $0xe8] sm:$0xff]
  %v63 = vld [vmem:[%s0 + $0xf0] sm:$0xff]
  %v64 = vld [vmem:[%s0 + $0xf8] sm:$0xff]
  %v65 = vld [vmem:[%s0 + $0x100] sm:$0xff]
  %v66 = vld [vmem:[%s0 + $0x108] sm:$0xff]
  %v67 = vld [vmem:[%s0 + $0x110] sm:$0xff]
  %v68 = vld [vmem:[%s0 + $0x118] sm:$0xff]
  %v69 = vld [vmem:[%s0 + $0x120] sm:$0xff]
  %v70 = vld [vmem:[%s0 + $0x128] sm:$0xff]
  %v71 = vld [vmem:[%s0 + $0x130] sm:$0xff]
  %v72 = vld [vmem:[%s0 + $0x138] sm:$0xff]
  %v73 = vld [vmem:[%s0 + $0x140] sm:$0xff]
  %v74 = vld [vmem:[%s0 + $0x148] sm:$0xff]
  %v75 = vld [vmem:[%s0 + $0x150] sm:$0xff]
  %v76 = vld [vmem:[%s0 + $0x158] sm:$0xff]
  %v77 = vld [vmem:[%s0 + $0x160] sm:$0xff]
  %v78 = vld [vmem:[%s0 + $0x168] sm:$0xff]
  %v79 = vld [vmem:[%s0 + $0x170] sm:$0xff]
  %v80 = vld [vmem:[%s0 + $0x178] sm:$0xff]
  %v81 = vld [vmem:[%s0 + $0x180] sm:$0xff]
  %v82 = vld [vmem:[%s0 + $0x188] sm:$0xff]
  %v83 = vld [vmem:[%s0 + $0x190] sm:$0xff]
  %v84 = vld [vmem:[%s0 + $0x198] sm:$0xff]
  %v85 = vld [vmem:[%s0 + $0x1a0] sm:$0xff]
  %v86 = vld [vmem:[%s0 + $0x1a8] sm:$0xff]
  %v87 = vld [vmem:[%s0 + $0x1b0] sm:$0xff]
  %v88 = vld [vmem:[%s0 + $0x1b8] sm:$0xff]
  %v89 = vpack.c.bf16 %v40, %v33
  %v90 = vpack.c.bf16 %v41, %v34
  %v91 = vpack.c.bf16 %v42, %v35
  %v92 = vpack.c.bf16 %v43, %v36
  %v93 = vpack.c.bf16 %v44, %v37
  %v94 = vpack.c.bf16 %v45, %v38
  %v95 = vpack.c.bf16 %v46, %v39
  %v96 = vpack.c.bf16 %v54, %v47
  %v97 = vpack.c.bf16 %v55, %v48
  %v98 = vpack.c.bf16 %v56, %v49
  %v99 = vpack.c.bf16 %v57, %v50
  %v100 = vpack.c.bf16 %v58, %v51
  %v101 = vpack.c.bf16 %v59, %v52
  %v102 = vpack.c.bf16 %v60, %v53
  %v103 = vpack.c.bf16 %v68, %v61
  %v104 = vpack.c.bf16 %v69, %v62
  %v105 = vpack.c.bf16 %v70, %v63
  %v106 = vpack.c.bf16 %v71, %v64
  %v107 = vpack.c.bf16 %v72, %v65
  %v108 = vpack.c.bf16 %v73, %v66
  %v109 = vpack.c.bf16 %v74, %v67
  %v110 = vpack.c.bf16 %v82, %v75
  %v111 = vpack.c.bf16 %v83, %v76
  %v112 = vpack.c.bf16 %v84, %v77
  %v113 = vpack.c.bf16 %v85, %v78
  %v114 = vpack.c.bf16 %v86, %v79
  %v115 = vpack.c.bf16 %v87, %v80
  %v116 = vpack.c.bf16 %v88, %v81
  %v117 = vld [vmem:[%s1] sm:$0xf]
  %v118 = vld [vmem:[%s1 + $0x4] sm:$0xf]
  %v119 = vld [vmem:[%s1 + $0x8] sm:$0xf]
  %v120 = vld [vmem:[%s1 + $0xc] sm:$0xf]
  %v121 = vld [vmem:[%s1 + $0x10] sm:$0xf]
  %v122 = vld [vmem:[%s1 + $0x14] sm:$0xf]
  %v123 = vld [vmem:[%s1 + $0x18] sm:$0xf]
  %v124 = vld [vmem:[%s1 + $0x1c] sm:$0xf]
  %v125 = vld [vmem:[%s1 + $0x20] sm:$0xf]
  %v126 = vld [vmem:[%s1 + $0x24] sm:$0xf]
  %v127 = vld [vmem:[%s1 + $0x28] sm:$0xf]
  %v128 = vld [vmem:[%s1 + $0x2c] sm:$0xf]
  %v129 = vld [vmem:[%s1 + $0x30] sm:$0xf]
  %v130 = vld [vmem:[%s1 + $0x34] sm:$0xf]
  %v131 = vld [vmem:[%s1 + $0x38] sm:$0xf]
  %v132 = vld [vmem:[%s1 + $0x3c] sm:$0xf]
  %v133 = vld [vmem:[%s1 + $0x40] sm:$0xf]
  %v134 = vld [vmem:[%s1 + $0x44] sm:$0xf]
  %v135 = vld [vmem:[%s1 + $0x48] sm:$0xf]
  %v136 = vld [vmem:[%s1 + $0x4c] sm:$0xf]
  %v137 = vld [vmem:[%s1 + $0x50] sm:$0xf]
  %v138 = vld [vmem:[%s1 + $0x54] sm:$0xf]
  %v139 = vld [vmem:[%s1 + $0x58] sm:$0xf]
  %v140 = vld [vmem:[%s1 + $0x5c] sm:$0xf]
  %v141 = vld [vmem:[%s1 + $0x60] sm:$0xf]
  %v142 = vld [vmem:[%s1 + $0x64] sm:$0xf]
  %v143 = vld [vmem:[%s1 + $0x68] sm:$0xf]
  %v144 = vld [vmem:[%s1 + $0x6c] sm:$0xf]
  %v145 = vld [vmem:[%s1 + $0x70] sm:$0xf]
  %v146 = vld [vmem:[%s1 + $0x74] sm:$0xf]
  %v147 = vld [vmem:[%s1 + $0x78] sm:$0xf]
  %v148 = vld [vmem:[%s1 + $0x7c] sm:$0xf]
  %v149 = vld [vmem:[%s1 + $0x80] sm:$0xf]
  %v150 = vld [vmem:[%s1 + $0x84] sm:$0xf]
  %v151 = vld [vmem:[%s1 + $0x88] sm:$0xf]
  %v152 = vld [vmem:[%s1 + $0x8c] sm:$0xf]
  %v153 = vld [vmem:[%s1 + $0x90] sm:$0xf]
  %v154 = vld [vmem:[%s1 + $0x94] sm:$0xf]
  %v155 = vld [vmem:[%s1 + $0x98] sm:$0xf]
  %v156 = vld [vmem:[%s1 + $0x9c] sm:$0xf]
  %v157 = vld [vmem:[%s1 + $0xa0] sm:$0xf]
  %v158 = vld [vmem:[%s1 + $0xa4] sm:$0xf]
  %v159 = vld [vmem:[%s1 + $0xa8] sm:$0xf]
  %v160 = vld [vmem:[%s1 + $0xac] sm:$0xf]
  %v161 = vld [vmem:[%s1 + $0xb0] sm:$0xf]
  %v162 = vld [vmem:[%s1 + $0xb4] sm:$0xf]
  %v163 = vld [vmem:[%s1 + $0xb8] sm:$0xf]
  %v164 = vld [vmem:[%s1 + $0xbc] sm:$0xf]
  %v165 = vld [vmem:[%s1 + $0xc0] sm:$0xf]
  %v166 = vld [vmem:[%s1 + $0xc4] sm:$0xf]
  %v167 = vld [vmem:[%s1 + $0xc8] sm:$0xf]
  %v168 = vld [vmem:[%s1 + $0xcc] sm:$0xf]
  %v169 = vld [vmem:[%s1 + $0xd0] sm:$0xf]
  %v170 = vld [vmem:[%s1 + $0xd4] sm:$0xf]
  %v171 = vld [vmem:[%s1 + $0xd8] sm:$0xf]
  %v172 = vld [vmem:[%s1 + $0xdc] sm:$0xf]
  %v173 = vld [vmem:[%s1 + $0xe0] sm:$0xf]
  %v174 = vld [vmem:[%s1 + $0xe4] sm:$0xf]
  %v175 = vld [vmem:[%s1 + $0xe8] sm:$0xf]
  %v176 = vld [vmem:[%s1 + $0xec] sm:$0xf]
  %v177 = vld [vmem:[%s1 + $0xf0] sm:$0xf]
  %v178 = vld [vmem:[%s1 + $0xf4] sm:$0xf]
  %v179 = vld [vmem:[%s1 + $0xf8] sm:$0xf]
  %v180 = vld [vmem:[%s1 + $0xfc] sm:$0xf]
  %v181 = vld [vmem:[%s1 + $0x100] sm:$0xf]
  %v182 = vld [vmem:[%s1 + $0x104] sm:$0xf]
  %v183 = vld [vmem:[%s1 + $0x108] sm:$0xf]
  %v184 = vld [vmem:[%s1 + $0x10c] sm:$0xf]
  %v185 = vld [vmem:[%s1 + $0x110] sm:$0xf]
  %v186 = vld [vmem:[%s1 + $0x114] sm:$0xf]
  %v187 = vld [vmem:[%s1 + $0x118] sm:$0xf]
  %v188 = vld [vmem:[%s1 + $0x11c] sm:$0xf]
  %v189 = vld [vmem:[%s1 + $0x120] sm:$0xf]
  %v190 = vld [vmem:[%s1 + $0x124] sm:$0xf]
  %v191 = vld [vmem:[%s1 + $0x128] sm:$0xf]
  %v192 = vld [vmem:[%s1 + $0x12c] sm:$0xf]
  %v193 = vld [vmem:[%s1 + $0x130] sm:$0xf]
  %v194 = vld [vmem:[%s1 + $0x134] sm:$0xf]
  %v195 = vld [vmem:[%s1 + $0x138] sm:$0xf]
  %v196 = vld [vmem:[%s1 + $0x13c] sm:$0xf]
  %v197 = vld [vmem:[%s1 + $0x140] sm:$0xf]
  %v198 = vld [vmem:[%s1 + $0x144] sm:$0xf]
  %v199 = vld [vmem:[%s1 + $0x148] sm:$0xf]
  %v200 = vld [vmem:[%s1 + $0x14c] sm:$0xf]
  %v201 = vld [vmem:[%s1 + $0x150] sm:$0xf]
  %v202 = vld [vmem:[%s1 + $0x154] sm:$0xf]
  %v203 = vld [vmem:[%s1 + $0x158] sm:$0xf]
  %v204 = vld [vmem:[%s1 + $0x15c] sm:$0xf]
  %v205 = vld [vmem:[%s1 + $0x160] sm:$0xf]
  %v206 = vld [vmem:[%s1 + $0x164] sm:$0xf]
  %v207 = vld [vmem:[%s1 + $0x168] sm:$0xf]
  %v208 = vld [vmem:[%s1 + $0x16c] sm:$0xf]
  %v209 = vld [vmem:[%s1 + $0x170] sm:$0xf]
  %v210 = vld [vmem:[%s1 + $0x174] sm:$0xf]
  %v211 = vld [vmem:[%s1 + $0x178] sm:$0xf]
  %v212 = vld [vmem:[%s1 + $0x17c] sm:$0xf]
  %v213 = vld [vmem:[%s1 + $0x180] sm:$0xf]
  %v214 = vld [vmem:[%s1 + $0x184] sm:$0xf]
  %v313 = vunpack.c.l.b16 %v117
  %v314 = vunpack.c.l.b16 %v118
  %v315 = vunpack.c.l.b16 %v119
  %v316 = vunpack.c.l.b16 %v120
  %v317 = vunpack.c.l.b16 %v121
  %v318 = vunpack.c.l.b16 %v122
  %v319 = vunpack.c.l.b16 %v123
  %v320 = vunpack.c.l.b16 %v124
  %v321 = vunpack.c.l.b16 %v125
  %v322 = vunpack.c.l.b16 %v126
  %v323 = vunpack.c.l.b16 %v127
  %v324 = vunpack.c.l.b16 %v128
  %v325 = vunpack.c.l.b16 %v129
  %v326 = vunpack.c.l.b16 %v130
  %v327 = vunpack.c.l.b16 %v131
  %v328 = vunpack.c.l.b16 %v132
  %v329 = vunpack.c.l.b16 %v133
  %v330 = vunpack.c.l.b16 %v134
  %v331 = vunpack.c.l.b16 %v135
  %v332 = vunpack.c.l.b16 %v136
  %v333 = vunpack.c.l.b16 %v137
  %v334 = vunpack.c.l.b16 %v138
  %v335 = vunpack.c.l.b16 %v139
  %v336 = vunpack.c.l.b16 %v140
  %v337 = vunpack.c.l.b16 %v141
  %v338 = vunpack.c.l.b16 %v142
  %v339 = vunpack.c.l.b16 %v143
  %v340 = vunpack.c.l.b16 %v144
  %v341 = vunpack.c.l.b16 %v145
  %v342 = vunpack.c.l.b16 %v146
  %v343 = vunpack.c.l.b16 %v147
  %v344 = vunpack.c.l.b16 %v148
  %v345 = vunpack.c.l.b16 %v149
  %v346 = vunpack.c.l.b16 %v150
  %v347 = vunpack.c.l.b16 %v151
  %v348 = vunpack.c.l.b16 %v152
  %v349 = vunpack.c.l.b16 %v153
  %v350 = vunpack.c.l.b16 %v154
  %v351 = vunpack.c.l.b16 %v155
  %v352 = vunpack.c.l.b16 %v156
  %v353 = vunpack.c.l.b16 %v157
  %v354 = vunpack.c.l.b16 %v158
  %v355 = vunpack.c.l.b16 %v159
  %v356 = vunpack.c.l.b16 %v160
  %v357 = vunpack.c.l.b16 %v161
  %v358 = vunpack.c.l.b16 %v162
  %v359 = vunpack.c.l.b16 %v163
  %v360 = vunpack.c.l.b16 %v164
  %v361 = vunpack.c.l.b16 %v165
  %v362 = vunpack.c.l.b16 %v166
  %v363 = vunpack.c.l.b16 %v167
  %v364 = vunpack.c.l.b16 %v168
  %v365 = vunpack.c.l.b16 %v169
  %v366 = vunpack.c.l.b16 %v170
  %v367 = vunpack.c.l.b16 %v171
  %v368 = vunpack.c.l.b16 %v172
  %v369 = vunpack.c.l.b16 %v173
  %v370 = vunpack.c.l.b16 %v174
  %v371 = vunpack.c.l.b16 %v175
  %v372 = vunpack.c.l.b16 %v176
  %v373 = vunpack.c.l.b16 %v177
  %v374 = vunpack.c.l.b16 %v178
  %v375 = vunpack.c.l.b16 %v179
  %v376 = vunpack.c.l.b16 %v180
  %v377 = vunpack.c.l.b16 %v181
  %v378 = vunpack.c.l.b16 %v182
  %v379 = vunpack.c.l.b16 %v183
  %v380 = vunpack.c.l.b16 %v184
  %v381 = vunpack.c.l.b16 %v185
  %v382 = vunpack.c.l.b16 %v186
  %v383 = vunpack.c.l.b16 %v187
  %v384 = vunpack.c.l.b16 %v188
  %v385 = vunpack.c.l.b16 %v189
  %v386 = vunpack.c.l.b16 %v190
  %v387 = vunpack.c.l.b16 %v191
  %v388 = vunpack.c.l.b16 %v192
  %v389 = vunpack.c.l.b16 %v193
  %v390 = vunpack.c.l.b16 %v194
  %v391 = vunpack.c.l.b16 %v195
  %v392 = vunpack.c.l.b16 %v196
  %v393 = vunpack.c.l.b16 %v197
  %v394 = vunpack.c.l.b16 %v198
  %v395 = vunpack.c.l.b16 %v199
  %v396 = vunpack.c.l.b16 %v200
  %v397 = vunpack.c.l.b16 %v201
  %v398 = vunpack.c.l.b16 %v202
  %v399 = vunpack.c.l.b16 %v203
  %v400 = vunpack.c.l.b16 %v204
  %v401 = vunpack.c.l.b16 %v205
  %v402 = vunpack.c.l.b16 %v206
  %v403 = vunpack.c.l.b16 %v207
  %v404 = vunpack.c.l.b16 %v208
  %v405 = vunpack.c.l.b16 %v209
  %v406 = vunpack.c.l.b16 %v210
  %v407 = vunpack.c.l.b16 %v211
  %v408 = vunpack.c.l.b16 %v212
  %v409 = vunpack.c.l.b16 %v213
  %v410 = vunpack.c.l.b16 %v214
  %v411 = vpack.c.b16 %v314, %v313
  %v412 = vpack.c.b16 %v316, %v315
  %v413 = vpack.c.b16 %v318, %v317
  %v414 = vpack.c.b16 %v320, %v319
  %v415 = vpack.c.b16 %v322, %v321
  %v416 = vpack.c.b16 %v324, %v323
  %v417 = vpack.c.b16 %v326, %v325
  %v418 = vpack.c.b16 %v328, %v327
  %v419 = vpack.c.b16 %v330, %v329
  %v420 = vpack.c.b16 %v332, %v331
  %v421 = vpack.c.b16 %v334, %v333
  %v422 = vpack.c.b16 %v336, %v335
  %v423 = vpack.c.b16 %v338, %v337
  %v424 = vpack.c.b16 %v340, %v339
  %v425 = vpack.c.b16 %v342, %v341
  %v426 = vpack.c.b16 %v344, %v343
  %v427 = vpack.c.b16 %v346, %v345
  %v428 = vpack.c.b16 %v348, %v347
  %v429 = vpack.c.b16 %v350, %v349
  %v430 = vpack.c.b16 %v352, %v351
  %v431 = vpack.c.b16 %v354, %v353
  %v432 = vpack.c.b16 %v356, %v355
  %v433 = vpack.c.b16 %v358, %v357
  %v434 = vpack.c.b16 %v360, %v359
  %v435 = vpack.c.b16 %v362, %v361
  %v436 = vpack.c.b16 %v364, %v363
  %v437 = vpack.c.b16 %v366, %v365
  %v438 = vpack.c.b16 %v368, %v367
  %v439 = vpack.c.b16 %v370, %v369
  %v440 = vpack.c.b16 %v372, %v371
  %v441 = vpack.c.b16 %v374, %v373
  %v442 = vpack.c.b16 %v376, %v375
  %v443 = vpack.c.b16 %v378, %v377
  %v444 = vpack.c.b16 %v380, %v379
  %v445 = vpack.c.b16 %v382, %v381
  %v446 = vpack.c.b16 %v384, %v383
  %v447 = vpack.c.b16 %v386, %v385
  %v448 = vpack.c.b16 %v388, %v387
  %v449 = vpack.c.b16 %v390, %v389
  %v450 = vpack.c.b16 %v392, %v391
  %v451 = vpack.c.b16 %v394, %v393
  %v452 = vpack.c.b16 %v396, %v395
  %v453 = vpack.c.b16 %v398, %v397
  %v454 = vpack.c.b16 %v400, %v399
  %v455 = vpack.c.b16 %v402, %v401
  %v456 = vpack.c.b16 %v404, %v403
  %v457 = vpack.c.b16 %v406, %v405
  %v458 = vpack.c.b16 %v408, %v407
  %v459 = vpack.c.b16 %v410, %v409
  %vm509 = vcmask 130048
  %v511 = vsel %vm509, %v95, 0
  %v514 = vsel %vm509, %v102, 0
  %v517 = vsel %vm509, %v109, 0
  %v520 = vsel %vm509, %v116, 0
  %522 = vmatprep.subr.bf16.mxu0 0
  %523 = vmatpush1.bf16.msra.mxu0 %v411
  %524 = vmatprep.subr.bf16.mxu0 0
  %525 = vmatpush1.bf16.msra.mxu0 %v412
  %526 = vmatprep.subr.bf16.mxu0 0
  %527 = vmatpush1.bf16.msra.mxu0 %v413
  %528 = vmatprep.subr.bf16.mxu0 0
  %529 = vmatpush1.bf16.msra.mxu0 %v414
  %530 = vmatprep.subr.bf16.mxu0 0
  %531 = vmatpush1.bf16.msra.mxu0 %v415
  %532 = vmatprep.subr.bf16.mxu0 0
  %533 = vmatpush1.bf16.msra.mxu0 %v416
  %534 = vmatprep.subr.bf16.mxu0 0
  %535 = vmatpush1.bf16.msra.mxu0 %v417
  %536 = vmatprep.subr.bf16.mxu0 0
  %537 = vmatpush1.bf16.msra.mxu0 %v418
  %538 = vmatprep.subr.bf16.mxu0 0
  %539 = vmatpush1.bf16.msra.mxu0 %v419
  %540 = vmatprep.subr.bf16.mxu0 0
  %541 = vmatpush1.bf16.msra.mxu0 %v420
  %542 = vmatprep.subr.bf16.mxu0 0
  %543 = vmatpush1.bf16.msra.mxu0 %v421
  %544 = vmatprep.subr.bf16.mxu0 0
  %545 = vmatpush1.bf16.msra.mxu0 %v422
  %546 = vmatprep.subr.bf16.mxu0 0
  %547 = vmatpush1.bf16.msra.mxu0 %v423
  %548 = vmatprep.subr.bf16.mxu0 0
  %549 = vmatpush1.bf16.msra.mxu0 %v424
  %550 = vmatprep.subr.bf16.mxu0 0
  %551 = vmatpush1.bf16.msra.mxu0 %v425
  %552 = vmatprep.subr.bf16.mxu0 0
  %553 = vmatpush1.bf16.msra.mxu0 %v426
  %554 = vmatprep.mubr.bf16.mxu0 %v90
  %555 = vmatmul.mubr.bf16.gmra.mrb[0].mxu0 %v89
  %v556 = vpop.f32.mrb[0].mxu0
  %v557 = vadd.f32 0.0, %v556
  %v558 = vpop.f32.mrb[0].mxu0
  %v559 = vpop.f32.mrb[0].mxu0
  %v560 = vadd.f32 0.0, %v559
  %v561 = vpop.f32.mrb[0].mxu0
  %562 = vmatprep.mubr.bf16.mxu0 %v97
  %563 = vmatmul.mubr.bf16.gmra.mrb[0].mxu0 %v96
  %v564 = vpop.f32.mrb[0].mxu0
  %v565 = vadd.f32 0.0, %v564
  %v566 = vpop.f32.mrb[0].mxu0
  %v567 = vpop.f32.mrb[0].mxu0
  %v568 = vadd.f32 0.0, %v567
  %v569 = vpop.f32.mrb[0].mxu0
  %570 = vmatprep.mubr.bf16.mxu0 %v104
  %571 = vmatmul.mubr.bf16.gmra.mrb[0].mxu0 %v103
  %v572 = vpop.f32.mrb[0].mxu0
  %v573 = vadd.f32 0.0, %v572
  %v574 = vpop.f32.mrb[0].mxu0
  %v575 = vpop.f32.mrb[0].mxu0
  %v576 = vadd.f32 0.0, %v575
  %v577 = vpop.f32.mrb[0].mxu0
  %578 = vmatprep.mubr.bf16.mxu0 %v111
  %579 = vmatmul.mubr.bf16.gmra.mrb[0].mxu0 %v110
  %v580 = vpop.f32.mrb[0].mxu0
  %v581 = vadd.f32 0.0, %v580
  %v582 = vpop.f32.mrb[0].mxu0
  %v583 = vpop.f32.mrb[0].mxu0
  %v584 = vadd.f32 0.0, %v583
  %v585 = vpop.f32.mrb[0].mxu0
  %586 = vdwg.mxu0
  %587 = vmatprep.subr.bf16.mxu0 0
  %588 = vmatpush1.bf16.msra.mxu0 %v427
  %589 = vmatprep.subr.bf16.mxu0 0
  %590 = vmatpush1.bf16.msra.mxu0 %v428
  %591 = vmatprep.subr.bf16.mxu0 0
  %592 = vmatpush1.bf16.msra.mxu0 %v429
  %593 = vmatprep.subr.bf16.mxu0 0
  %594 = vmatpush1.bf16.msra.mxu0 %v430
  %595 = vmatprep.subr.bf16.mxu0 0
  %596 = vmatpush1.bf16.msra.mxu0 %v431
  %597 = vmatprep.subr.bf16.mxu0 0
  %598 = vmatpush1.bf16.msra.mxu0 %v432
  %599 = vmatprep.subr.bf16.mxu0 0
  %600 = vmatpush1.bf16.msra.mxu0 %v433
  %601 = vmatprep.subr.bf16.mxu0 0
  %602 = vmatpush1.bf16.msra.mxu0 %v434
  %603 = vmatprep.subr.bf16.mxu0 0
  %604 = vmatpush1.bf16.msra.mxu0 %v435
  %605 = vmatprep.subr.bf16.mxu0 0
  %606 = vmatpush1.bf16.msra.mxu0 %v436
  %607 = vmatprep.subr.bf16.mxu0 0
  %608 = vmatpush1.bf16.msra.mxu0 %v437
  %609 = vmatprep.subr.bf16.mxu0 0
  %610 = vmatpush1.bf16.msra.mxu0 %v438
  %611 = vmatprep.subr.bf16.mxu0 0
  %612 = vmatpush1.bf16.msra.mxu0 %v439
  %613 = vmatprep.subr.bf16.mxu0 0
  %614 = vmatpush1.bf16.msra.mxu0 %v440
  %615 = vmatprep.subr.bf16.mxu0 0
  %616 = vmatpush1.bf16.msra.mxu0 %v441
  %617 = vmatprep.subr.bf16.mxu0 0
  %618 = vmatpush1.bf16.msra.mxu0 %v442
  %619 = vmatprep.mubr.bf16.mxu0 %v92
  %620 = vmatmul.mubr.bf16.gmra.mrb[0].mxu0 %v91
  %v621 = vpop.f32.mrb[0].mxu0
  %v622 = vadd.f32 %v557, %v621
  %v623 = vpop.f32.mrb[0].mxu0
  %v624 = vpop.f32.mrb[0].mxu0
  %v625 = vadd.f32 %v560, %v624
  %v626 = vpop.f32.mrb[0].mxu0
  %627 = vmatprep.mubr.bf16.mxu0 %v99
  %628 = vmatmul.mubr.bf16.gmra.mrb[0].mxu0 %v98
  %v629 = vpop.f32.mrb[0].mxu0
  %v630 = vadd.f32 %v565, %v629
  %v631 = vpop.f32.mrb[0].mxu0
  %v632 = vpop.f32.mrb[0].mxu0
  %v633 = vadd.f32 %v568, %v632
  %v634 = vpop.f32.mrb[0].mxu0
  %635 = vmatprep.mubr.bf16.mxu0 %v106
  %636 = vmatmul.mubr.bf16.gmra.mrb[0].mxu0 %v105
  %v637 = vpop.f32.mrb[0].mxu0
  %v638 = vadd.f32 %v573, %v637
  %v639 = vpop.f32.mrb[0].mxu0
  %v640 = vpop.f32.mrb[0].mxu0
  %v641 = vadd.f32 %v576, %v640
  %v642 = vpop.f32.mrb[0].mxu0
  %643 = vmatprep.mubr.bf16.mxu0 %v113
  %644 = vmatmul.mubr.bf16.gmra.mrb[0].mxu0 %v112
  %v645 = vpop.f32.mrb[0].mxu0
  %v646 = vadd.f32 %v581, %v645
  %v647 = vpop.f32.mrb[0].mxu0
  %v648 = vpop.f32.mrb[0].mxu0
  %v649 = vadd.f32 %v584, %v648
  %v650 = vpop.f32.mrb[0].mxu0
  %651 = vdwg.mxu0
  %652 = vmatprep.subr.bf16.mxu0 0
  %653 = vmatpush1.bf16.msra.mxu0 %v443
  %654 = vmatprep.subr.bf16.mxu0 0
  %655 = vmatpush1.bf16.msra.mxu0 %v444
  %656 = vmatprep.subr.bf16.mxu0 0
  %657 = vmatpush1.bf16.msra.mxu0 %v445
  %658 = vmatprep.subr.bf16.mxu0 0
  %659 = vmatpush1.bf16.msra.mxu0 %v446
  %660 = vmatprep.subr.bf16.mxu0 0
  %661 = vmatpush1.bf16.msra.mxu0 %v447
  %662 = vmatprep.subr.bf16.mxu0 0
  %663 = vmatpush1.bf16.msra.mxu0 %v448
  %664 = vmatprep.subr.bf16.mxu0 0
  %665 = vmatpush1.bf16.msra.mxu0 %v449
  %666 = vmatprep.subr.bf16.mxu0 0
  %667 = vmatpush1.bf16.msra.mxu0 %v450
  %668 = vmatprep.subr.bf16.mxu0 0
  %669 = vmatpush1.bf16.msra.mxu0 %v451
  %670 = vmatprep.subr.bf16.mxu0 0
  %671 = vmatpush1.bf16.msra.mxu0 %v452
  %672 = vmatprep.subr.bf16.mxu0 0
  %673 = vmatpush1.bf16.msra.mxu0 %v453
  %674 = vmatprep.subr.bf16.mxu0 0
  %675 = vmatpush1.bf16.msra.mxu0 %v454
  %676 = vmatprep.subr.bf16.mxu0 0
  %677 = vmatpush1.bf16.msra.mxu0 %v455
  %678 = vmatprep.subr.bf16.mxu0 0
  %679 = vmatpush1.bf16.msra.mxu0 %v456
  %680 = vmatprep.subr.bf16.mxu0 0
  %681 = vmatpush1.bf16.msra.mxu0 %v457
  %682 = vmatprep.subr.bf16.mxu0 0
  %683 = vmatpush1.bf16.msra.mxu0 %v458
  %684 = vmatprep.mubr.bf16.mxu0 %v94
  %685 = vmatmul.mubr.bf16.gmra.mrb[0].mxu0 %v93
  %v686 = vpop.f32.mrb[0].mxu0
  %v687 = vadd.f32 %v622, %v686
  %v688 = vpop.f32.mrb[0].mxu0
  %v689 = vpop.f32.mrb[0].mxu0
  %v690 = vadd.f32 %v625, %v689
  %v691 = vpop.f32.mrb[0].mxu0
  %692 = vmatprep.mubr.bf16.mxu0 %v101
  %693 = vmatmul.mubr.bf16.gmra.mrb[0].mxu0 %v100
  %v694 = vpop.f32.mrb[0].mxu0
  %v695 = vadd.f32 %v630, %v694
  %v696 = vpop.f32.mrb[0].mxu0
  %v697 = vpop.f32.mrb[0].mxu0
  %v698 = vadd.f32 %v633, %v697
  %v699 = vpop.f32.mrb[0].mxu0
  %700 = vmatprep.mubr.bf16.mxu0 %v108
  %701 = vmatmul.mubr.bf16.gmra.mrb[0].mxu0 %v107
  %v702 = vpop.f32.mrb[0].mxu0
  %v703 = vadd.f32 %v638, %v702
  %v704 = vpop.f32.mrb[0].mxu0
  %v705 = vpop.f32.mrb[0].mxu0
  %v706 = vadd.f32 %v641, %v705
  %v707 = vpop.f32.mrb[0].mxu0
  %708 = vmatprep.mubr.bf16.mxu0 %v115
  %709 = vmatmul.mubr.bf16.gmra.mrb[0].mxu0 %v114
  %v710 = vpop.f32.mrb[0].mxu0
  %v711 = vadd.f32 %v646, %v710
  %v712 = vpop.f32.mrb[0].mxu0
  %v713 = vpop.f32.mrb[0].mxu0
  %v714 = vadd.f32 %v649, %v713
  %v715 = vpop.f32.mrb[0].mxu0
  %716 = vdwg.mxu0
  %717 = vmatprep.subr.bf16.mxu0 0
  %718 = vmatpush1.bf16.msra.mxu0 %v459
  %719 = vmatprep.subr.bf16.mxu0 0
  %720 = vmatpush1.bf16.msra.mxu0 0
  %721 = vmatprep.subr.bf16.mxu0 0
  %722 = vmatpush1.bf16.msra.mxu0 0
  %723 = vmatprep.subr.bf16.mxu0 0
  %724 = vmatpush1.bf16.msra.mxu0 0
  %725 = vmatprep.subr.bf16.mxu0 0
  %726 = vmatpush1.bf16.msra.mxu0 0
  %727 = vmatprep.subr.bf16.mxu0 0
  %728 = vmatpush1.bf16.msra.mxu0 0
  %729 = vmatprep.subr.bf16.mxu0 0
  %730 = vmatpush1.bf16.msra.mxu0 0
  %731 = vmatprep.subr.bf16.mxu0 0
  %732 = vmatpush1.bf16.msra.mxu0 0
  %733 = vmatprep.subr.bf16.mxu0 0
  %734 = vmatpush1.bf16.msra.mxu0 0
  %735 = vmatprep.subr.bf16.mxu0 0
  %736 = vmatpush1.bf16.msra.mxu0 0
  %737 = vmatprep.subr.bf16.mxu0 0
  %738 = vmatpush1.bf16.msra.mxu0 0
  %739 = vmatprep.subr.bf16.mxu0 0
  %740 = vmatpush1.bf16.msra.mxu0 0
  %741 = vmatprep.subr.bf16.mxu0 0
  %742 = vmatpush1.bf16.msra.mxu0 0
  %743 = vmatprep.subr.bf16.mxu0 0
  %744 = vmatpush1.bf16.msra.mxu0 0
  %745 = vmatprep.subr.bf16.mxu0 0
  %746 = vmatpush1.bf16.msra.mxu0 0
  %747 = vmatprep.subr.bf16.mxu0 0
  %748 = vmatpush1.bf16.msra.mxu0 0
  %749 = vmatprep.mubr.bf16.mxu0 0
  %750 = vmatmul.mubr.bf16.gmra.mrb[0].mxu0 %v511
  %v751 = vpop.f32.mrb[0].mxu0
  %v752 = vadd.f32 %v687, %v751
  %v753 = vpop.f32.mrb[0].mxu0
  %v754 = vpop.f32.mrb[0].mxu0
  %v755 = vadd.f32 %v690, %v754
  %v756 = vpop.f32.mrb[0].mxu0
  %757 = vmatprep.mubr.bf16.mxu0 0
  %758 = vmatmul.mubr.bf16.gmra.mrb[0].mxu0 %v514
  %v759 = vpop.f32.mrb[0].mxu0
  %v760 = vadd.f32 %v695, %v759
  %v761 = vpop.f32.mrb[0].mxu0
  %v762 = vpop.f32.mrb[0].mxu0
  %v763 = vadd.f32 %v698, %v762
  %v764 = vpop.f32.mrb[0].mxu0
  %765 = vmatprep.mubr.bf16.mxu0 0
  %766 = vmatmul.mubr.bf16.gmra.mrb[0].mxu0 %v517
  %v767 = vpop.f32.mrb[0].mxu0
  %v768 = vadd.f32 %v703, %v767
  %v769 = vpop.f32.mrb[0].mxu0
  %v770 = vpop.f32.mrb[0].mxu0
  %v771 = vadd.f32 %v706, %v770
  %v772 = vpop.f32.mrb[0].mxu0
  %773 = vmatprep.mubr.bf16.mxu0 0
  %774 = vmatmul.mubr.bf16.gmra.mrb[0].mxu0 %v520
  %v775 = vpop.f32.mrb[0].mxu0
  %v776 = vadd.f32 %v711, %v775
  %v777 = vpop.f32.mrb[0].mxu0
  %v778 = vpop.f32.mrb[0].mxu0
  %v779 = vadd.f32 %v714, %v778
  %v780 = vpop.f32.mrb[0].mxu0
  %781 = vdwg.mxu0
  %v782 = vld [vmem:[%s2] sm:$0x1]
  %v783 = vld [vmem:[%s3] sm:$0x1]
  %vm784 = vcmask 392192
  %v785 = vsel %vm784, %v752, 0.0
  %v786 = vsel %vm784, %v755, 0.0
  %v787 = vadd.f32 %v785, %v786
  %v788 = vsel %vm784, %v760, 0.0
  %v789 = vadd.f32 %v787, %v788
  %v790 = vsel %vm784, %v763, 0.0
  %v791 = vadd.f32 %v789, %v790
  %v792 = vsel %vm784, %v768, 0.0
  %v793 = vadd.f32 %v791, %v792
  %v794 = vsel %vm784, %v771, 0.0
  %v795 = vadd.f32 %v793, %v794
  %v796 = vsel %vm784, %v776, 0.0
  %v797 = vadd.f32 %v795, %v796
  %v798 = vsel %vm784, %v779, 0.0
  %v799 = vadd.f32 %v797, %v798
  %v800 = vrot.slane %v799, 4
  %v801 = vadd.f32 %v799, %v800
  %v802 = vrot.slane %v801, 2
  %v803 = vadd.f32 %v801, %v802
  %v804 = vrot.slane %v803, 1
  %v805 = vadd.f32 %v803, %v804
  %v806 = vmul.f32 %v805, 0.015625
  %v807 = vsub.f32 %v752, %v806
  %v808 = vsub.f32 %v755, %v806
  %v809 = vsub.f32 %v760, %v806
  %v810 = vsub.f32 %v763, %v806
  %v811 = vsub.f32 %v768, %v806
  %v812 = vsub.f32 %v771, %v806
  %v813 = vsub.f32 %v776, %v806
  %v814 = vsub.f32 %v779, %v806
  %v815 = vmul.f32 %v807, %v807
  %v816 = vmul.f32 %v808, %v808
  %v817 = vmul.f32 %v809, %v809
  %v818 = vmul.f32 %v810, %v810
  %v819 = vmul.f32 %v811, %v811
  %v820 = vmul.f32 %v812, %v812
  %v821 = vmul.f32 %v813, %v813
  %v822 = vmul.f32 %v814, %v814
  %v823 = vsel %vm784, %v815, 0.0
  %v824 = vsel %vm784, %v816, 0.0
  %v825 = vadd.f32 %v823, %v824
  %v826 = vsel %vm784, %v817, 0.0
  %v827 = vadd.f32 %v825, %v826
  %v828 = vsel %vm784, %v818, 0.0
  %v829 = vadd.f32 %v827, %v828
  %v830 = vsel %vm784, %v819, 0.0
  %v831 = vadd.f32 %v829, %v830
  %v832 = vsel %vm784, %v820, 0.0
  %v833 = vadd.f32 %v831, %v832
  %v834 = vsel %vm784, %v821, 0.0
  %v835 = vadd.f32 %v833, %v834
  %v836 = vsel %vm784, %v822, 0.0
  %v837 = vadd.f32 %v835, %v836
  %v838 = vrot.slane %v837, 4
  %v839 = vadd.f32 %v837, %v838
  %v840 = vrot.slane %v839, 2
  %v841 = vadd.f32 %v839, %v840
  %v842 = vrot.slane %v841, 1
  %v843 = vadd.f32 %v841, %v842
  %v844 = vmul.f32 %v843, 0.015625
  %v845 = vadd.f32 %v844, 1e-05
  %v846 = vrsqrt.pop %v845
  %v847 = vmul.f32 %v782, %v846
  %v848 = vmul.f32 %v806, %v847
  %v849 = vsub.f32 %v783, %v848
  %v851 = vlaneseq
  %v852 = vshrl.u32 %v851, 7
  %v853 = vsub.s32 0, %v852
  %v854 = vrot.slane %v847, %v853
  %v856 = vmul.f32 %v752, %v854
  %v857 = vmul.f32 %v755, %v854
  %v858 = vmul.f32 %v760, %v854
  %v859 = vmul.f32 %v763, %v854
  %v860 = vmul.f32 %v768, %v854
  %v861 = vmul.f32 %v771, %v854
  %v862 = vmul.f32 %v776, %v854
  %v863 = vmul.f32 %v779, %v854
  %v865 = vlaneseq
  %v866 = vshrl.u32 %v865, 7
  %v867 = vsub.s32 0, %v866
  %v868 = vrot.slane %v849, %v867
  %v870 = vadd.f32 %v856, %v868
  %v871 = vadd.f32 %v857, %v868
  %v872 = vadd.f32 %v858, %v868
  %v873 = vadd.f32 %v859, %v868
  %v874 = vadd.f32 %v860, %v868
  %v875 = vadd.f32 %v861, %v868
  %v876 = vadd.f32 %v862, %v868
  %v877 = vadd.f32 %v863, %v868
  %v878 = vmax.f32 %v870, 0.0
  %v879 = vmax.f32 %v871, 0.0
  %v880 = vmax.f32 %v872, 0.0
  %v881 = vmax.f32 %v873, 0.0
  %v882 = vmax.f32 %v874, 0.0
  %v883 = vmax.f32 %v875, 0.0
  %v884 = vmax.f32 %v876, 0.0
  %v885 = vmax.f32 %v877, 0.0
  %v886 = vld [vmem:[%s4] sm:$0xff]
  %v887 = vld [vmem:[%s4 + $0x8] sm:$0xff]
  %v888 = vld [vmem:[%s4 + $0x10] sm:$0xff]
  %v889 = vld [vmem:[%s4 + $0x18] sm:$0xff]
  %v890 = vld [vmem:[%s4 + $0x20] sm:$0xff]
  %v891 = vld [vmem:[%s4 + $0x28] sm:$0xff]
  %v893 = vsel %vm784, %v878, 0
  %v896 = vsel %vm784, %v879, 0
  %v899 = vsel %vm784, %v880, 0
  %v902 = vsel %vm784, %v881, 0
  %v905 = vsel %vm784, %v882, 0
  %v908 = vsel %vm784, %v883, 0
  %v911 = vsel %vm784, %v884, 0
  %v914 = vsel %vm784, %v885, 0
  %916 = vmatprep.subr.mxu0 0.0
  %917 = vmatpush1.msra.mxu0 %v886
  %918 = vmatprep.subr.mxu0 0.0
  %919 = vmatpush1.msra.mxu0 %v887
  %920 = vmatprep.subr.mxu0 0.0
  %921 = vmatpush1.msra.mxu0 %v888
  %922 = vmatprep.subr.mxu0 0.0
  %923 = vmatpush1.msra.mxu0 %v889
  %924 = vmatprep.subr.mxu0 0.0
  %925 = vmatpush1.msra.mxu0 %v890
  %926 = vmatprep.subr.mxu0 0.0
  %927 = vmatpush1.msra.mxu0 %v891
  %928 = vmatprep.subr.mxu0 0.0
  %929 = vmatpush1.msra.mxu0 0.0
  %930 = vmatprep.subr.mxu0 0.0
  %931 = vmatpush1.msra.mxu0 0.0
  %932 = vmatprep.subr.mxu0 0.0
  %933 = vmatpush1.msra.mxu0 0.0
  %934 = vmatprep.subr.mxu0 0.0
  %935 = vmatpush1.msra.mxu0 0.0
  %936 = vmatprep.subr.mxu0 0.0
  %937 = vmatpush1.msra.mxu0 0.0
  %938 = vmatprep.subr.mxu0 0.0
  %939 = vmatpush1.msra.mxu0 0.0
  %940 = vmatprep.subr.mxu0 0.0
  %941 = vmatpush1.msra.mxu0 0.0
  %942 = vmatprep.subr.mxu0 0.0
  %943 = vmatpush1.msra.mxu0 0.0
  %944 = vmatprep.subr.mxu0 0.0
  %945 = vmatpush1.msra.mxu0 0.0
  %946 = vmatprep.subr.mxu0 0.0
  %947 = vmatpush1.msra.mxu0 0.0
  %948 = vmatprep.subr.mxu0 0.0
  %949 = vmatpush1.msra.mxu0 0.0
  %950 = vmatprep.subr.mxu0 0.0
  %951 = vmatpush1.msra.mxu0 0.0
  %952 = vmatprep.subr.mxu0 0.0
  %953 = vmatpush1.msra.mxu0 0.0
  %954 = vmatprep.subr.mxu0 0.0
  %955 = vmatpush1.msra.mxu0 0.0
  %956 = vmatprep.subr.mxu0 0.0
  %957 = vmatpush1.msra.mxu0 0.0
  %958 = vmatprep.subr.mxu0 0.0
  %959 = vmatpush1.msra.mxu0 0.0
  %960 = vmatprep.subr.mxu0 0.0
  %961 = vmatpush1.msra.mxu0 0.0
  %962 = vmatprep.subr.mxu0 0.0
  %963 = vmatpush1.msra.mxu0 0.0
  %964 = vmatprep.subr.mxu0 0.0
  %965 = vmatpush1.msra.mxu0 0.0
  %966 = vmatprep.subr.mxu0 0.0
  %967 = vmatpush1.msra.mxu0 0.0
  %968 = vmatprep.subr.mxu0 0.0
  %969 = vmatpush1.msra.mxu0 0.0
  %970 = vmatprep.subr.mxu0 0.0
  %971 = vmatpush1.msra.mxu0 0.0
  %972 = vmatprep.subr.mxu0 0.0
  %973 = vmatpush1.msra.mxu0 0.0
  %974 = vmatprep.subr.mxu0 0.0
  %975 = vmatpush1.msra.mxu0 0.0
  %976 = vmatprep.subr.mxu0 0.0
  %977 = vmatpush1.msra.mxu0 0.0
  %978 = vmatprep.subr.mxu0 0.0
  %979 = vmatpush1.msra.mxu0 0.0
  %980 = vmatprep.mubr.f32.mxu0 0.0
  %981 = vmatmul.mubr.f32.gmra.mrb[0].mxu0 %v893
  %v982 = vpop.f32.mrb[0].mxu0
  %v983 = vadd.f32 0.0, %v982
  %v984 = vpop.f32.mrb[0].mxu0
  %985 = vmatprep.mubr.f32.mxu0 0.0
  %986 = vmatmul.mubr.f32.gmra.mrb[0].mxu0 %v896
  %v987 = vpop.f32.mrb[0].mxu0
  %v988 = vadd.f32 0.0, %v987
  %v989 = vpop.f32.mrb[0].mxu0
  %990 = vmatprep.mubr.f32.mxu0 0.0
  %991 = vmatmul.mubr.f32.gmra.mrb[0].mxu0 %v899
  %v992 = vpop.f32.mrb[0].mxu0
  %v993 = vadd.f32 0.0, %v992
  %v994 = vpop.f32.mrb[0].mxu0
  %995 = vmatprep.mubr.f32.mxu0 0.0
  %996 = vmatmul.mubr.f32.gmra.mrb[0].mxu0 %v902
  %v997 = vpop.f32.mrb[0].mxu0
  %v998 = vadd.f32 0.0, %v997
  %v999 = vpop.f32.mrb[0].mxu0
  %1000 = vmatprep.mubr.f32.mxu0 0.0
  %1001 = vmatmul.mubr.f32.gmra.mrb[0].mxu0 %v905
  %v1002 = vpop.f32.mrb[0].mxu0
  %v1003 = vadd.f32 0.0, %v1002
  %v1004 = vpop.f32.mrb[0].mxu0
  %1005 = vmatprep.mubr.f32.mxu0 0.0
  %1006 = vmatmul.mubr.f32.gmra.mrb[0].mxu0 %v908
  %v1007 = vpop.f32.mrb[0].mxu0
  %v1008 = vadd.f32 0.0, %v1007
  %v1009 = vpop.f32.mrb[0].mxu0
  %1010 = vmatprep.mubr.f32.mxu0 0.0
  %1011 = vmatmul.mubr.f32.gmra.mrb[0].mxu0 %v911
  %v1012 = vpop.f32.mrb[0].mxu0
  %v1013 = vadd.f32 0.0, %v1012
  %v1014 = vpop.f32.mrb[0].mxu0
  %1015 = vmatprep.mubr.f32.mxu0 0.0
  %1016 = vmatmul.mubr.f32.gmra.mrb[0].mxu0 %v914
  %v1017 = vpop.f32.mrb[0].mxu0
  %v1018 = vadd.f32 0.0, %v1017
  %v1019 = vpop.f32.mrb[0].mxu0
  %1020 = vdwg.mxu0
  %v1021 = vld [vmem:[%s5] sm:$0x1]
  %v1022 = vld [vmem:[%s6] sm:$0x1]
  %vm1023 = vcmask 195584
  %v1024 = vsel %vm1023, %v983, 0.0
  %v1025 = vsel %vm1023, %v988, 0.0
  %v1026 = vadd.f32 %v1024, %v1025
  %v1027 = vsel %vm1023, %v993, 0.0
  %v1028 = vadd.f32 %v1026, %v1027
  %v1029 = vsel %vm1023, %v998, 0.0
  %v1030 = vadd.f32 %v1028, %v1029
  %v1031 = vsel %vm1023, %v1003, 0.0
  %v1032 = vadd.f32 %v1030, %v1031
  %v1033 = vsel %vm1023, %v1008, 0.0
  %v1034 = vadd.f32 %v1032, %v1033
  %v1035 = vsel %vm1023, %v1013, 0.0
  %v1036 = vadd.f32 %v1034, %v1035
  %v1037 = vsel %vm1023, %v1018, 0.0
  %v1038 = vadd.f32 %v1036, %v1037
  %v1039 = vrot.slane %v1038, 4
  %v1040 = vadd.f32 %v1038, %v1039
  %v1041 = vrot.slane %v1040, 2
  %v1042 = vadd.f32 %v1040, %v1041
  %v1043 = vrot.slane %v1042, 1
  %v1044 = vadd.f32 %v1042, %v1043
  %v1045 = vmul.f32 %v1044, 0.015625
  %v1046 = vsub.f32 %v983, %v1045
  %v1047 = vsub.f32 %v988, %v1045
  %v1048 = vsub.f32 %v993, %v1045
  %v1049 = vsub.f32 %v998, %v1045
  %v1050 = vsub.f32 %v1003, %v1045
  %v1051 = vsub.f32 %v1008, %v1045
  %v1052 = vsub.f32 %v1013, %v1045
  %v1053 = vsub.f32 %v1018, %v1045
  %v1054 = vmul.f32 %v1046, %v1046
  %v1055 = vmul.f32 %v1047, %v1047
  %v1056 = vmul.f32 %v1048, %v1048
  %v1057 = vmul.f32 %v1049, %v1049
  %v1058 = vmul.f32 %v1050, %v1050
  %v1059 = vmul.f32 %v1051, %v1051
  %v1060 = vmul.f32 %v1052, %v1052
  %v1061 = vmul.f32 %v1053, %v1053
  %v1062 = vsel %vm1023, %v1054, 0.0
  %v1063 = vsel %vm1023, %v1055, 0.0
  %v1064 = vadd.f32 %v1062, %v1063
  %v1065 = vsel %vm1023, %v1056, 0.0
  %v1066 = vadd.f32 %v1064, %v1065
  %v1067 = vsel %vm1023, %v1057, 0.0
  %v1068 = vadd.f32 %v1066, %v1067
  %v1069 = vsel %vm1023, %v1058, 0.0
  %v1070 = vadd.f32 %v1068, %v1069
  %v1071 = vsel %vm1023, %v1059, 0.0
  %v1072 = vadd.f32 %v1070, %v1071
  %v1073 = vsel %vm1023, %v1060, 0.0
  %v1074 = vadd.f32 %v1072, %v1073
  %v1075 = vsel %vm1023, %v1061, 0.0
  %v1076 = vadd.f32 %v1074, %v1075
  %v1077 = vrot.slane %v1076, 4
  %v1078 = vadd.f32 %v1076, %v1077
  %v1079 = vrot.slane %v1078, 2
  %v1080 = vadd.f32 %v1078, %v1079
  %v1081 = vrot.slane %v1080, 1
  %v1082 = vadd.f32 %v1080, %v1081
  %v1083 = vmul.f32 %v1082, 0.015625
  %v1084 = vadd.f32 %v1083, 1e-05
  %v1085 = vrsqrt.pop %v1084
  %v1086 = vmul.f32 %v1021, %v1085
  %v1087 = vmul.f32 %v1045, %v1086
  %v1088 = vsub.f32 %v1022, %v1087
  %v1090 = vlaneseq
  %v1091 = vshrl.u32 %v1090, 7
  %v1092 = vsub.s32 0, %v1091
  %v1093 = vrot.slane %v1086, %v1092
  %v1095 = vmul.f32 %v983, %v1093
  %v1096 = vmul.f32 %v988, %v1093
  %v1097 = vmul.f32 %v993, %v1093
  %v1098 = vmul.f32 %v998, %v1093
  %v1099 = vmul.f32 %v1003, %v1093
  %v1100 = vmul.f32 %v1008, %v1093
  %v1101 = vmul.f32 %v1013, %v1093
  %v1102 = vmul.f32 %v1018, %v1093
  %v1104 = vlaneseq
  %v1105 = vshrl.u32 %v1104, 7
  %v1106 = vsub.s32 0, %v1105
  %v1107 = vrot.slane %v1088, %v1106
  %v1109 = vadd.f32 %v1095, %v1107
  %v1110 = vadd.f32 %v1096, %v1107
  %v1111 = vadd.f32 %v1097, %v1107
  %v1112 = vadd.f32 %v1098, %v1107
  %v1113 = vadd.f32 %v1099, %v1107
  %v1114 = vadd.f32 %v1100, %v1107
  %v1115 = vadd.f32 %v1101, %v1107
  %v1116 = vadd.f32 %v1102, %v1107
  %v1117 = vmax.f32 %v1109, 0.0
  %v1118 = vmax.f32 %v1110, 0.0
  %v1119 = vmax.f32 %v1111, 0.0
  %v1120 = vmax.f32 %v1112, 0.0
  %v1121 = vmax.f32 %v1113, 0.0
  %v1122 = vmax.f32 %v1114, 0.0
  %v1123 = vmax.f32 %v1115, 0.0
  %v1124 = vmax.f32 %v1116, 0.0
  %v1125 = vld [vmem:[%s7] sm:$0xff]
  %v1126 = vld [vmem:[%s7 + $0x8] sm:$0xff]
  %v1127 = vld [vmem:[%s7 + $0x10] sm:$0xff]
  %v1128 = vld [vmem:[%s8] sm:$0x1]
  %v1130 = vlaneseq
  %v1131 = vshrl.u32 %v1130, 7
  %v1132 = vsub.s32 0, %v1131
  %v1133 = vrot.slane %v1128, %v1132
  %v1136 = vsel %vm1023, %v1117, 0
  %v1139 = vsel %vm1023, %v1118, 0
  %v1142 = vsel %vm1023, %v1119, 0
  %v1145 = vsel %vm1023, %v1120, 0
  %v1148 = vsel %vm1023, %v1121, 0
  %v1151 = vsel %vm1023, %v1122, 0
  %v1154 = vsel %vm1023, %v1123, 0
  %v1157 = vsel %vm1023, %v1124, 0
  %1159 = vmatprep.subr.mxu0 0.0
  %1160 = vmatpush1.msra.mxu0 %v1125
  %1161 = vmatprep.subr.mxu0 0.0
  %1162 = vmatpush1.msra.mxu0 %v1126
  %1163 = vmatprep.subr.mxu0 0.0
  %1164 = vmatpush1.msra.mxu0 %v1127
  %1165 = vmatprep.subr.mxu0 0.0
  %1166 = vmatpush1.msra.mxu0 0.0
  %1167 = vmatprep.subr.mxu0 0.0
  %1168 = vmatpush1.msra.mxu0 0.0
  %1169 = vmatprep.subr.mxu0 0.0
  %1170 = vmatpush1.msra.mxu0 0.0
  %1171 = vmatprep.subr.mxu0 0.0
  %1172 = vmatpush1.msra.mxu0 0.0
  %1173 = vmatprep.subr.mxu0 0.0
  %1174 = vmatpush1.msra.mxu0 0.0
  %1175 = vmatprep.subr.mxu0 0.0
  %1176 = vmatpush1.msra.mxu0 0.0
  %1177 = vmatprep.subr.mxu0 0.0
  %1178 = vmatpush1.msra.mxu0 0.0
  %1179 = vmatprep.subr.mxu0 0.0
  %1180 = vmatpush1.msra.mxu0 0.0
  %1181 = vmatprep.subr.mxu0 0.0
  %1182 = vmatpush1.msra.mxu0 0.0
  %1183 = vmatprep.subr.mxu0 0.0
  %1184 = vmatpush1.msra.mxu0 0.0
  %1185 = vmatprep.subr.mxu0 0.0
  %1186 = vmatpush1.msra.mxu0 0.0
  %1187 = vmatprep.subr.mxu0 0.0
  %1188 = vmatpush1.msra.mxu0 0.0
  %1189 = vmatprep.subr.mxu0 0.0
  %1190 = vmatpush1.msra.mxu0 0.0
  %1191 = vmatprep.subr.mxu0 0.0
  %1192 = vmatpush1.msra.mxu0 0.0
  %1193 = vmatprep.subr.mxu0 0.0
  %1194 = vmatpush1.msra.mxu0 0.0
  %1195 = vmatprep.subr.mxu0 0.0
  %1196 = vmatpush1.msra.mxu0 0.0
  %1197 = vmatprep.subr.mxu0 0.0
  %1198 = vmatpush1.msra.mxu0 0.0
  %1199 = vmatprep.subr.mxu0 0.0
  %1200 = vmatpush1.msra.mxu0 0.0
  %1201 = vmatprep.subr.mxu0 0.0
  %1202 = vmatpush1.msra.mxu0 0.0
  %1203 = vmatprep.subr.mxu0 0.0
  %1204 = vmatpush1.msra.mxu0 0.0
  %1205 = vmatprep.subr.mxu0 0.0
  %1206 = vmatpush1.msra.mxu0 0.0
  %1207 = vmatprep.subr.mxu0 0.0
  %1208 = vmatpush1.msra.mxu0 0.0
  %1209 = vmatprep.subr.mxu0 0.0
  %1210 = vmatpush1.msra.mxu0 0.0
  %1211 = vmatprep.subr.mxu0 0.0
  %1212 = vmatpush1.msra.mxu0 0.0
  %1213 = vmatprep.subr.mxu0 0.0
  %1214 = vmatpush1.msra.mxu0 0.0
  %1215 = vmatprep.subr.mxu0 0.0
  %1216 = vmatpush1.msra.mxu0 0.0
  %1217 = vmatprep.subr.mxu0 0.0
  %1218 = vmatpush1.msra.mxu0 0.0
  %1219 = vmatprep.subr.mxu0 0.0
  %1220 = vmatpush1.msra.mxu0 0.0
  %1221 = vmatprep.subr.mxu0 0.0
  %1222 = vmatpush1.msra.mxu0 0.0
  %1223 = vmatprep.mubr.f32.mxu0 0.0
  %1224 = vmatmul.mubr.f32.gmra.mrb[0].mxu0 %v1136
  %v1225 = vpop.f32.mrb[0].mxu0
  %v1226 = vadd.f32 %v1133, %v1225
  %v1227 = vpop.f32.mrb[0].mxu0
  %1228 = vmatprep.mubr.f32.mxu0 0.0
  %1229 = vmatmul.mubr.f32.gmra.mrb[0].mxu0 %v1139
  %v1230 = vpop.f32.mrb[0].mxu0
  %v1231 = vadd.f32 %v1133, %v1230
  %v1232 = vpop.f32.mrb[0].mxu0
  %1233 = vmatprep.mubr.f32.mxu0 0.0
  %1234 = vmatmul.mubr.f32.gmra.mrb[0].mxu0 %v1142
  %v1235 = vpop.f32.mrb[0].mxu0
  %v1236 = vadd.f32 %v1133, %v1235
  %v1237 = vpop.f32.mrb[0].mxu0
  %1238 = vmatprep.mubr.f32.mxu0 0.0
  %1239 = vmatmul.mubr.f32.gmra.mrb[0].mxu0 %v1145
  %v1240 = vpop.f32.mrb[0].mxu0
  %v1241 = vadd.f32 %v1133, %v1240
  %v1242 = vpop.f32.mrb[0].mxu0
  %1243 = vmatprep.mubr.f32.mxu0 0.0
  %1244 = vmatmul.mubr.f32.gmra.mrb[0].mxu0 %v1148
  %v1245 = vpop.f32.mrb[0].mxu0
  %v1246 = vadd.f32 %v1133, %v1245
  %v1247 = vpop.f32.mrb[0].mxu0
  %1248 = vmatprep.mubr.f32.mxu0 0.0
  %1249 = vmatmul.mubr.f32.gmra.mrb[0].mxu0 %v1151
  %v1250 = vpop.f32.mrb[0].mxu0
  %v1251 = vadd.f32 %v1133, %v1250
  %v1252 = vpop.f32.mrb[0].mxu0
  %1253 = vmatprep.mubr.f32.mxu0 0.0
  %1254 = vmatmul.mubr.f32.gmra.mrb[0].mxu0 %v1154
  %v1255 = vpop.f32.mrb[0].mxu0
  %v1256 = vadd.f32 %v1133, %v1255
  %v1257 = vpop.f32.mrb[0].mxu0
  %1258 = vmatprep.mubr.f32.mxu0 0.0
  %1259 = vmatmul.mubr.f32.gmra.mrb[0].mxu0 %v1157
  %v1260 = vpop.f32.mrb[0].mxu0
  %v1261 = vadd.f32 %v1133, %v1260
  %v1262 = vpop.f32.mrb[0].mxu0
  %1263 = vdwg.mxu0
  %1264 = vst.msk [vmem:[%s9] sm:$0xff] %vm509, %v1226
  %1265 = vst.msk [vmem:[%s9 + $0x8] sm:$0xff] %vm509, %v1231
  %1266 = vst.msk [vmem:[%s9 + $0x10] sm:$0xff] %vm509, %v1236
  %1267 = vst.msk [vmem:[%s9 + $0x18] sm:$0xff] %vm509, %v1241
  %1268 = vst.msk [vmem:[%s9 + $0x20] sm:$0xff] %vm509, %v1246
  %1269 = vst.msk [vmem:[%s9 + $0x28] sm:$0xff] %vm509, %v1251
  %1270 = vst.msk [vmem:[%s9 + $0x30] sm:$0xff] %vm509, %v1256
  %1271 = vst.msk [vmem:[%s9 + $0x38] sm:$0xff] %vm509, %v1261
  // Predicated region
  $region38: #{_forward_fused.1} parent=0 // pred_check
    _
  $region39: #{_forward_fused.1} parent=0 // pred_check_branch
    %1273 = sbr.rel (0) target = $region41
  $region40: #{_forward_fused.1} parent=0 // pred_region
    _
  $region41: #{_forward_fused.1} parent=0 // pred_fallthru
    _
  // Predicated region
  $region42: #{_forward_fused.1} parent=0 // pred_check
    _
  $region43: #{_forward_fused.1} parent=0 // pred_check_branch
    %1275 = sbr.rel (0) target = $region45
  $region44: #{_forward_fused.1} parent=0 // pred_region
    _
  $region45: #{_forward_fused.1} parent=0 // pred_fallthru
    _

</llo_original>
